<compile_context>
chip_gen: v7x
topology: tpu7x:2x2x1
jax: 0.10.0
libtpu: 0.0.40
codegen_flags: <defaults>
</compile_context>

<pallas_src>
import jax
import jax.numpy as jnp
from jax import lax
from jax.experimental import pallas as pl
from jax.experimental.pallas import tpu as pltpu


# ----------------------------------------------------------------------------
# Fused kernel factory: three_nn + three_interpolate + concat + SharedMLP
# ----------------------------------------------------------------------------
def _make_fp_kernel(num_layers, has_skip, c2, compute_dtype):
    f32_weights = jnp.dtype(compute_dtype) == jnp.dtype(jnp.float32)

    def kernel(*refs):
        idx = 0
        unknownT_ref = refs[idx]; idx += 1       # (1, 3, TN)   lane-dense queries
        known_ref = refs[idx]; idx += 1          # (1, m, 3)
        kfeat_ref = refs[idx]; idx += 1          # (1, C2, m)   compute_dtype
        if has_skip:
            ufeat_ref = refs[idx]; idx += 1      # (1, C1, TN)  compute_dtype
        params = refs[idx:-1]                    # per-layer weights / biases
        out_ref = refs[-1]                       # (1, Cout, TN)

        ut = unknownT_ref[0].astype(jnp.float32)   # (3, TN)
        kn = known_ref[0].astype(jnp.float32)      # (m, 3)
        tn = ut.shape[1]
        m = kn.shape[0]

        # Exact pairwise squared distances on the VPU, (m, TN)-major so the
        # interpolation below is a plain matmul over m.
        diff = kn[:, 0:1] - ut[0:1, :]                       # (m,1)-(1,TN)->(m,TN)
        d = diff * diff
        for c in (1, 2):
            diff = kn[:, c:c + 1] - ut[c:c + 1, :]
            d = d + diff * diff

        # 3 nearest neighbours + inverse-distance weights as a sparse (m, TN)
        # weight matrix.  `col` keeps first-argmin tie-breaking deterministic.
        col = lax.broadcasted_iota(jnp.int32, (m, tn), 0)
        big = jnp.float32(1e30)
        wmat = jnp.zeros((m, tn), jnp.float32)
        wsum = jnp.zeros((1, tn), jnp.float32)
        for _ in range(3):
            dmin = jnp.min(d, axis=0, keepdims=True)                     # (1, TN)
            first = jnp.min(jnp.where(d <= dmin, col, m),
                            axis=0, keepdims=True)                       # first argmin
            sel = col == first                                           # (m, TN)
            w = 1.0 / (jnp.sqrt(dmin) + 1e-8)    # matches torch 1/(dist+1e-8)
            wmat = wmat + w * sel.astype(jnp.float32)
            wsum = wsum + w
            d = jnp.where(sel, big, d)           # mask selected row

        feats = kfeat_ref[0]                                             # (C2, m)
        inv_wsum = 1.0 / wsum                                            # (1, TN)
        if f32_weights:
            # Contract over m on the MXU, normalize the (C2, TN) result
            # (saves (m - C2) * TN VPU multiplies vs. scaling wmat).
            interp = jnp.dot(feats, wmat, preferred_element_type=jnp.float32)
            interp = interp * inv_wsum                                   # (C2, TN)
        else:
            # bf16 path: normalize first so the cast sees weights in [0, 1].
            wn = (wmat * inv_wsum).astype(compute_dtype)
            interp = jnp.dot(feats, wn, preferred_element_type=jnp.float32)

        if has_skip:
            skip = ufeat_ref[0]                                          # (C1, TN)

        if num_layers == 0:
            # No MLP: output is [interp; skip] (concat written directly).
            if has_skip:
                out_ref[0, :c2, :] = interp.astype(out_ref.dtype)
                out_ref[0, c2:, :] = skip.astype(out_ref.dtype)
            else:
                out_ref[0] = interp.astype(out_ref.dtype)
            return

        # Layer 0: the channel concat is folded into the split weight
        # (W @ [interp; skip] == Wa @ interp + Wb @ skip).
        p = 0
        w_a = params[p][...]; p += 1                                     # (C0, C2)
        h = jnp.dot(w_a, interp.astype(compute_dtype),
                    preferred_element_type=jnp.float32)                  # (C0, TN)
        if has_skip:
            w_b = params[p][...]; p += 1                                 # (C0, C1)
            h = h + jnp.dot(w_b, skip, preferred_element_type=jnp.float32)
        b0 = params[p][...]; p += 1                                      # (C0, 1) f32
        h = jnp.maximum(h + b0, 0.0)

        # Remaining Conv1x1 + folded-BN + ReLU layers; activations stay in VMEM.
        for _ in range(1, num_layers):
            w = params[p][...]; p += 1
            b = params[p][...]; p += 1
            h = jnp.dot(w, h.astype(compute_dtype),
                        preferred_element_type=jnp.float32)
            h = jnp.maximum(h + b, 0.0)

        out_ref[0] = h.astype(out_ref.dtype)

    return kernel


# ----------------------------------------------------------------------------
# Generation-aware tiling / VMEM helpers
# ----------------------------------------------------------------------------
def _vmem_capacity_bytes():
    try:
        return int(pltpu.get_tpu_info().vmem_capacity_bytes)
    except Exception:
        return 64 << 20          # conservative fallback (v7x-sized)


def _pick_tile(n, m, capacity):
    """Largest n-tile (multiple of 128 dividing n) whose (m, TN) f32
    temporaries fit the per-generation budget; falls back to the smallest such
    tile, or the whole axis for small/odd n (block == full dims is legal)."""
    budget = (14 << 20) if capacity <= (64 << 20) else (40 << 20)
    for t in (1024, 512, 256, 128):
        if n % t == 0 and 8 * m * t * 4 <= budget:
            return t
    for t in (128, 256, 512, 1024):
        if n % t == 0:
            return t
    return n


def _vmem_limit_bytes(tn, m, c2, c1, layer_dims, c_out, capacity):
    """Scoped-VMEM request sized from the tile working set, clamped with
    headroom under the physical VMEM of the current generation."""
    io = 8 * tn + m * 128 + c2 * m + c1 * tn + c_out * tn       # block I/O (padded)
    params = sum(co * ci + co for co, ci in layer_dims)
    widths = [max(c2, c1, 1)] + [co for co, _ in layer_dims]
    temps = 7 * m * tn + (c2 + c1 + 2 * max(widths)) * tn       # live temporaries
    est = (2 * io + params + temps) * 4                         # double-buffered I/O
    cap = int(0.75 * capacity)                                  # 48 MiB v7x / 96 MiB v5e-v6e
    return int(min(max(2 * est, 32 << 20), cap))


# ----------------------------------------------------------------------------
# Forward wrapper
# ----------------------------------------------------------------------------
def pointnet_fp_forward(unknown, known, unknow_feats, known_feats, layers,
                        *, compute_dtype=jnp.bfloat16, tile_n=None):
    B, n, _ = unknown.shape
    _, m, _ = known.shape
    _, C2, _ = known_feats.shape
    has_skip = unknow_feats is not None
    C1 = unknow_feats.shape[1] if has_skip else 0
    num_layers = len(layers)
    out_dtype = known_feats.dtype

    capacity = _vmem_capacity_bytes()
    tn = _pick_tile(n, m, capacity) if tile_n is None else tile_n
    # Megacore-friendly grid on v7x: if B == 1, make sure both TCs get tiles.
    if B == 1 and n // tn < 2 and tn % 256 == 0:
        tn //= 2
    assert n % tn == 0
    n_tiles = n // tn

    # One-time XLA transpose so the query tiles are lane-dense (3, TN) inside
    # the kernel; `known` stays (B, m, 3) giving natural (m, 1) coord columns.
    unknownT = jnp.transpose(unknown, (0, 2, 1)).astype(jnp.float32)   # (B, 3, n)
    known_f32 = known.astype(jnp.float32)
    # Hoisted casts: grid-invariant blocks arrive already in compute dtype.
    kfeat_c = known_feats.astype(compute_dtype)
    ufeat_c = unknow_feats.astype(compute_dtype) if has_skip else None

    in_arrays = [unknownT, known_f32, kfeat_c]
    in_specs = [
        pl.BlockSpec((1, 3, tn), lambda b, t: (b, 0, t)),
        pl.BlockSpec((1, m, 3), lambda b, t: (b, 0, 0)),
        pl.BlockSpec((1, C2, m), lambda b, t: (b, 0, 0)),
    ]
    if has_skip:
        in_arrays.append(ufeat_c)
        in_specs.append(pl.BlockSpec((1, C1, tn), lambda b, t: (b, 0, t)))

    layer_dims = []
    for li, (w, bvec) in enumerate(layers):
        co, ci = w.shape
        layer_dims.append((co, ci))
        if li == 0 and has_skip:
            parts = [w[:, :C2].astype(compute_dtype),
                     w[:, C2:].astype(compute_dtype),
                     bvec.reshape(co, 1).astype(jnp.float32)]
        else:
            parts = [w.astype(compute_dtype),
                     bvec.reshape(co, 1).astype(jnp.float32)]
        for arr in parts:
            in_arrays.append(arr)
            # Constant block index -> stays resident in VMEM across the grid.
            in_specs.append(pl.BlockSpec(arr.shape, lambda b, t: (0, 0)))

    c_out = layers[-1][0].shape[0] if num_layers else C2 + C1
    kernel = _make_fp_kernel(num_layers, has_skip, C2, compute_dtype)

    return pl.pallas_call(
        kernel,
        out_shape=jax.ShapeDtypeStruct((B, c_out, n), out_dtype),
        grid=(B, n_tiles),
        in_specs=in_specs,
        out_specs=pl.BlockSpec((1, c_out, tn), lambda b, t: (b, 0, t)),
        compiler_params=pltpu.CompilerParams(
            dimension_semantics=("parallel", "parallel"),
            vmem_limit_bytes=_vmem_limit_bytes(tn, m, C2, C1, layer_dims,
                                               c_out, capacity)),
    )(*in_arrays)


# ----------------------------------------------------------------------------
# Module wrapper (parameter setup is plain-JAX glue)
# ----------------------------------------------------------------------------
class PointnetFPModulePallas:
    def __init__(self, mlp, bn=True, key=None, use_bf16=True):
        # use_bf16: bf16 MXU operands with f32 accumulation (~2x MXU rate and
        # half the resident weight / feature bytes on v6e/v7x).
        self.bn = bn
        self.compute_dtype = jnp.bfloat16 if use_bf16 else jnp.float32
        if key is None:
            key = jax.random.PRNGKey(42)
        self.layers = []   # list of (w_eff, b_eff) with BN folded in (f32 master)
        for li in range(len(mlp) - 1):
            cin, cout = mlp[li], mlp[li + 1]
            key, kw, kb, kg, kbeta, km, kv = jax.random.split(key, 7)
            w = jax.random.normal(kw, (cout, cin), jnp.float32) * 0.1
            conv_bias = (jnp.zeros((cout,), jnp.float32) if bn
                         else jax.random.normal(kb, (cout,), jnp.float32) * 0.1)
            if bn:
                gamma = 1.0 + 0.1 * jax.random.normal(kg, (cout,), jnp.float32)
                beta = 0.1 * jax.random.normal(kbeta, (cout,), jnp.float32)
                mean = 0.1 * jax.random.normal(km, (cout,), jnp.float32)
                var = jnp.abs(jax.random.normal(kv, (cout,), jnp.float32)) + 0.5
                scale = gamma / jnp.sqrt(var + 1e-5)
                w_eff = scale[:, None] * w
                b_eff = scale * (conv_bias - mean) + beta
            else:
                w_eff, b_eff = w, conv_bias
            self.layers.append((w_eff, b_eff))

    def __call__(self, unknown, known, unknow_feats, known_feats):
        return pointnet_fp_forward(unknown, known, unknow_feats, known_feats,
                                   self.layers, compute_dtype=self.compute_dtype)


# ----------------------------------------------------------------------------
# Pure-JAX reference for correctness check
# ----------------------------------------------------------------------------
def reference_forward(module, unknown, known, unknow_feats, known_feats):
    d2 = jnp.sum((unknown[:, :, None, :] - known[:, None, :, :]) ** 2, axis=-1)  # (B,n,m)
    neg, idx = lax.top_k(-d2, 3)
    dist = jnp.sqrt(jnp.maximum(-neg, 0.0))
    dist_recip = 1.0 / (dist + 1e-8)
    norm = jnp.sum(dist_recip, axis=2, keepdims=True)
    weight = dist_recip / norm                                                   # (B,n,3)
    gathered = jnp.take_along_axis(known_feats[:, :, None, :],
                                   idx[:, None, :, :], axis=-1)                  # (B,C2,n,3)
    interp = jnp.sum(gathered * weight[:, None, :, :], axis=-1)                  # (B,C2,n)
    x = jnp.concatenate([interp, unknow_feats], axis=1) if unknow_feats is not None else interp
    for (w_eff, b_eff) in module.layers:
        x = jnp.maximum(jnp.einsum("oc,bcn->bon", w_eff, x) + b_eff[None, :, None], 0.0)
    return x


if __name__ == "__main__":
    B, n, m = 2, 16, 8          # n unknown points, m known points
    C1, C2 = 4, 6               # skip-connection feats, propagated feats
    mlp = [C1 + C2, 16, 8]

    key = jax.random.PRNGKey(0)
    k1, k2, k3, k4 = jax.random.split(key, 4)
    unknown = jax.random.normal(k1, (B, n, 3), jnp.float32)
    known = jax.random.normal(k2, (B, m, 3), jnp.float32)
    unknow_feats = jax.random.normal(k3, (B, C1, n), jnp.float32)
    known_feats = jax.random.normal(k4, (B, C2, m), jnp.float32)

    # f32 path: exact check against the pure-JAX reference.
    module_f32 = PointnetFPModulePallas(mlp, bn=True, use_bf16=False)
    out = jax.block_until_ready(module_f32(unknown, known, unknow_feats, known_feats))
    assert out.shape == (B, mlp[-1], n), out.shape
    ref = reference_forward(module_f32, unknown, known, unknow_feats, known_feats)
    assert jnp.allclose(out, ref, atol=1e-4, rtol=1e-4), \
        float(jnp.max(jnp.abs(out - ref)))

    # default (bf16 MXU) path: loose check against the same f32 reference.
    module_bf16 = PointnetFPModulePallas(mlp, bn=True)
    out_bf = jax.block_until_ready(
        module_bf16(unknown, known, unknow_feats, known_feats))
    assert out_bf.shape == (B, mlp[-1], n), out_bf.shape
    assert jnp.allclose(out_bf.astype(jnp.float32), ref, atol=5e-2, rtol=5e-2), \
        float(jnp.max(jnp.abs(out_bf.astype(jnp.float32) - ref)))

    print("KERNEL_OK")
</pallas_src>

<mosaic_0001>
module attributes {stable_mosaic.version = 11 : i64} {
  func.func @kernel(%arg0: i32, %arg1: i32, %arg2: memref<1x3x16xf32, #tpu.memory_space<vmem>>, %arg3: memref<1x8x3xf32, #tpu.memory_space<vmem>>, %arg4: memref<1x6x8xf32, #tpu.memory_space<vmem>>, %arg5: memref<1x4x16xf32, #tpu.memory_space<vmem>>, %arg6: memref<16x6xf32, #tpu.memory_space<vmem>>, %arg7: memref<16x4xf32, #tpu.memory_space<vmem>>, %arg8: memref<16x1xf32, #tpu.memory_space<vmem>>, %arg9: memref<8x16xf32, #tpu.memory_space<vmem>>, %arg10: memref<8x1xf32, #tpu.memory_space<vmem>>, %arg11: memref<1x8x16xf32, #tpu.memory_space<vmem>>) attributes {dimension_semantics = [#tpu.dimension_semantics<parallel>, #tpu.dimension_semantics<parallel>], iteration_bounds = array<i64: 2, 1>, scalar_prefetch = 0 : i64, scratch_operands = 0 : i64, tpu.core_type = #tpu.core_type<tc>, window_params = [{transform_indices = @transform_0, window_bounds = array<i64: 1, 3, 16>}, {transform_indices = @transform_1, window_bounds = array<i64: 1, 8, 3>}, {transform_indices = @transform_2, window_bounds = array<i64: 1, 6, 8>}, {transform_indices = @transform_3, window_bounds = array<i64: 1, 4, 16>}, {pipeline_mode = #tpu.pipeline_mode<synchronous>, transform_indices = @transform_4, window_bounds = array<i64: 16, 6>}, {pipeline_mode = #tpu.pipeline_mode<synchronous>, transform_indices = @transform_5, window_bounds = array<i64: 16, 4>}, {pipeline_mode = #tpu.pipeline_mode<synchronous>, transform_indices = @transform_6, window_bounds = array<i64: 16, 1>}, {pipeline_mode = #tpu.pipeline_mode<synchronous>, transform_indices = @transform_7, window_bounds = array<i64: 8, 16>}, {pipeline_mode = #tpu.pipeline_mode<synchronous>, transform_indices = @transform_8, window_bounds = array<i64: 8, 1>}, {transform_indices = @transform_9, window_bounds = array<i64: 1, 8, 16>}]} {
    %c0 = arith.constant 0 : index
    %c0_0 = arith.constant 0 : index
    %c0_1 = arith.constant 0 : index
    %0 = vector.load %arg2[%c0, %c0_0, %c0_1] : memref<1x3x16xf32, #tpu.memory_space<vmem>>, vector<1x3x16xf32>
    %1 = vector.shape_cast %0 : vector<1x3x16xf32> to vector<3x16xf32>
    %c0_2 = arith.constant 0 : index
    %c0_3 = arith.constant 0 : index
    %c0_4 = arith.constant 0 : index
    %2 = vector.load %arg3[%c0_2, %c0_3, %c0_4] : memref<1x8x3xf32, #tpu.memory_space<vmem>>, vector<1x8x3xf32>
    %3 = vector.shape_cast %2 : vector<1x8x3xf32> to vector<8x3xf32>
    %4 = vector.extract_strided_slice %3 {offsets = [0, 0], sizes = [8, 1], strides = [1, 1]} : vector<8x3xf32> to vector<8x1xf32>
    %5 = vector.extract_strided_slice %1 {offsets = [0, 0], sizes = [1, 16], strides = [1, 1]} : vector<3x16xf32> to vector<1x16xf32>
    %6 = vector.broadcast %4 : vector<8x1xf32> to vector<8x16xf32>
    %7 = vector.broadcast %5 : vector<1x16xf32> to vector<8x16xf32>
    %8 = arith.subf %6, %7 : vector<8x16xf32>
    %9 = arith.mulf %8, %8 : vector<8x16xf32>
    %10 = vector.extract_strided_slice %3 {offsets = [0, 1], sizes = [8, 1], strides = [1, 1]} : vector<8x3xf32> to vector<8x1xf32>
    %11 = vector.extract_strided_slice %1 {offsets = [1, 0], sizes = [1, 16], strides = [1, 1]} : vector<3x16xf32> to vector<1x16xf32>
    %12 = vector.broadcast %10 : vector<8x1xf32> to vector<8x16xf32>
    %13 = vector.broadcast %11 : vector<1x16xf32> to vector<8x16xf32>
    %14 = arith.subf %12, %13 : vector<8x16xf32>
    %15 = arith.mulf %14, %14 : vector<8x16xf32>
    %16 = arith.addf %9, %15 : vector<8x16xf32>
    %17 = vector.extract_strided_slice %3 {offsets = [0, 2], sizes = [8, 1], strides = [1, 1]} : vector<8x3xf32> to vector<8x1xf32>
    %18 = vector.extract_strided_slice %1 {offsets = [2, 0], sizes = [1, 16], strides = [1, 1]} : vector<3x16xf32> to vector<1x16xf32>
    %19 = vector.broadcast %17 : vector<8x1xf32> to vector<8x16xf32>
    %20 = vector.broadcast %18 : vector<1x16xf32> to vector<8x16xf32>
    %21 = arith.subf %19, %20 : vector<8x16xf32>
    %22 = arith.mulf %21, %21 : vector<8x16xf32>
    %23 = arith.addf %16, %22 : vector<8x16xf32>
    %24 = tpu.iota {dimensions = array<i32: 0>} : vector<8x16xi32>
    %cst = arith.constant 0.000000e+00 : f32
    %25 = vector.broadcast %cst : f32 to vector<8x16xf32>
    %cst_5 = arith.constant 0.000000e+00 : f32
    %26 = vector.broadcast %cst_5 : f32 to vector<1x16xf32>
    %cst_6 = arith.constant dense<0x7F800000> : vector<16xf32>
    %27 = vector.multi_reduction <minimumf>, %23, %cst_6 [0] : vector<8x16xf32> to vector<16xf32>
    %28 = vector.shape_cast %27 : vector<16xf32> to vector<1x16xf32>
    %29 = vector.broadcast %28 : vector<1x16xf32> to vector<8x16xf32>
    %30 = arith.cmpf ole, %23, %29 : vector<8x16xf32>
    %c8_i32 = arith.constant 8 : i32
    %31 = vector.broadcast %c8_i32 : i32 to vector<8x16xi32>
    %32 = arith.select %30, %24, %31 : vector<8x16xi1>, vector<8x16xi32>
    %cst_7 = arith.constant dense<2147483647> : vector<16xi32>
    %33 = vector.multi_reduction <minsi>, %32, %cst_7 [0] : vector<8x16xi32> to vector<16xi32>
    %34 = vector.shape_cast %33 : vector<16xi32> to vector<1x16xi32>
    %35 = vector.broadcast %34 : vector<1x16xi32> to vector<8x16xi32>
    %36 = arith.cmpi eq, %24, %35 : vector<8x16xi32>
    %37 = math.sqrt %28 : vector<1x16xf32>
    %cst_8 = arith.constant 9.99999993E-9 : f32
    %38 = vector.broadcast %cst_8 : f32 to vector<1x16xf32>
    %39 = arith.addf %37, %38 : vector<1x16xf32>
    %cst_9 = arith.constant 1.000000e+00 : f32
    %40 = vector.broadcast %cst_9 : f32 to vector<1x16xf32>
    %41 = arith.divf %40, %39 : vector<1x16xf32>
    %42 = arith.extui %36 : vector<8x16xi1> to vector<8x16xi32>
    %43 = arith.sitofp %42 : vector<8x16xi32> to vector<8x16xf32>
    %44 = vector.broadcast %41 : vector<1x16xf32> to vector<8x16xf32>
    %45 = arith.mulf %44, %43 : vector<8x16xf32>
    %46 = arith.addf %25, %45 : vector<8x16xf32>
    %47 = arith.addf %26, %41 : vector<1x16xf32>
    %cst_10 = arith.constant 1.000000e+30 : f32
    %48 = vector.broadcast %cst_10 : f32 to vector<8x16xf32>
    %49 = arith.select %36, %48, %23 : vector<8x16xi1>, vector<8x16xf32>
    %cst_11 = arith.constant dense<0x7F800000> : vector<16xf32>
    %50 = vector.multi_reduction <minimumf>, %49, %cst_11 [0] : vector<8x16xf32> to vector<16xf32>
    %51 = vector.shape_cast %50 : vector<16xf32> to vector<1x16xf32>
    %52 = vector.broadcast %51 : vector<1x16xf32> to vector<8x16xf32>
    %53 = arith.cmpf ole, %49, %52 : vector<8x16xf32>
    %c8_i32_12 = arith.constant 8 : i32
    %54 = vector.broadcast %c8_i32_12 : i32 to vector<8x16xi32>
    %55 = arith.select %53, %24, %54 : vector<8x16xi1>, vector<8x16xi32>
    %cst_13 = arith.constant dense<2147483647> : vector<16xi32>
    %56 = vector.multi_reduction <minsi>, %55, %cst_13 [0] : vector<8x16xi32> to vector<16xi32>
    %57 = vector.shape_cast %56 : vector<16xi32> to vector<1x16xi32>
    %58 = vector.broadcast %57 : vector<1x16xi32> to vector<8x16xi32>
    %59 = arith.cmpi eq, %24, %58 : vector<8x16xi32>
    %60 = math.sqrt %51 : vector<1x16xf32>
    %cst_14 = arith.constant 9.99999993E-9 : f32
    %61 = vector.broadcast %cst_14 : f32 to vector<1x16xf32>
    %62 = arith.addf %60, %61 : vector<1x16xf32>
    %cst_15 = arith.constant 1.000000e+00 : f32
    %63 = vector.broadcast %cst_15 : f32 to vector<1x16xf32>
    %64 = arith.divf %63, %62 : vector<1x16xf32>
    %65 = arith.extui %59 : vector<8x16xi1> to vector<8x16xi32>
    %66 = arith.sitofp %65 : vector<8x16xi32> to vector<8x16xf32>
    %67 = vector.broadcast %64 : vector<1x16xf32> to vector<8x16xf32>
    %68 = arith.mulf %67, %66 : vector<8x16xf32>
    %69 = arith.addf %46, %68 : vector<8x16xf32>
    %70 = arith.addf %47, %64 : vector<1x16xf32>
    %cst_16 = arith.constant 1.000000e+30 : f32
    %71 = vector.broadcast %cst_16 : f32 to vector<8x16xf32>
    %72 = arith.select %59, %71, %49 : vector<8x16xi1>, vector<8x16xf32>
    %cst_17 = arith.constant dense<0x7F800000> : vector<16xf32>
    %73 = vector.multi_reduction <minimumf>, %72, %cst_17 [0] : vector<8x16xf32> to vector<16xf32>
    %74 = vector.shape_cast %73 : vector<16xf32> to vector<1x16xf32>
    %75 = vector.broadcast %74 : vector<1x16xf32> to vector<8x16xf32>
    %76 = arith.cmpf ole, %72, %75 : vector<8x16xf32>
    %c8_i32_18 = arith.constant 8 : i32
    %77 = vector.broadcast %c8_i32_18 : i32 to vector<8x16xi32>
    %78 = arith.select %76, %24, %77 : vector<8x16xi1>, vector<8x16xi32>
    %cst_19 = arith.constant dense<2147483647> : vector<16xi32>
    %79 = vector.multi_reduction <minsi>, %78, %cst_19 [0] : vector<8x16xi32> to vector<16xi32>
    %80 = vector.shape_cast %79 : vector<16xi32> to vector<1x16xi32>
    %81 = vector.broadcast %80 : vector<1x16xi32> to vector<8x16xi32>
    %82 = arith.cmpi eq, %24, %81 : vector<8x16xi32>
    %83 = math.sqrt %74 : vector<1x16xf32>
    %cst_20 = arith.constant 9.99999993E-9 : f32
    %84 = vector.broadcast %cst_20 : f32 to vector<1x16xf32>
    %85 = arith.addf %83, %84 : vector<1x16xf32>
    %cst_21 = arith.constant 1.000000e+00 : f32
    %86 = vector.broadcast %cst_21 : f32 to vector<1x16xf32>
    %87 = arith.divf %86, %85 : vector<1x16xf32>
    %88 = arith.extui %82 : vector<8x16xi1> to vector<8x16xi32>
    %89 = arith.sitofp %88 : vector<8x16xi32> to vector<8x16xf32>
    %90 = vector.broadcast %87 : vector<1x16xf32> to vector<8x16xf32>
    %91 = arith.mulf %90, %89 : vector<8x16xf32>
    %92 = arith.addf %69, %91 : vector<8x16xf32>
    %93 = arith.addf %70, %87 : vector<1x16xf32>
    %c0_22 = arith.constant 0 : index
    %c0_23 = arith.constant 0 : index
    %c0_24 = arith.constant 0 : index
    %94 = vector.load %arg4[%c0_22, %c0_23, %c0_24] : memref<1x6x8xf32, #tpu.memory_space<vmem>>, vector<1x6x8xf32>
    %95 = vector.shape_cast %94 : vector<1x6x8xf32> to vector<6x8xf32>
    %cst_25 = arith.constant 1.000000e+00 : f32
    %96 = vector.broadcast %cst_25 : f32 to vector<1x16xf32>
    %97 = arith.divf %96, %93 : vector<1x16xf32>
    %cst_26 = arith.constant dense<0.000000e+00> : vector<6x16xf32>
    %98 = tpu.matmul %95, %92, %cst_26 {dimension_numbers = #tpu.dot_dimension_numbers<[1], [0], [0], [1], [0, 0, 1, 1], [], []>} : vector<6x8xf32>, vector<8x16xf32>, vector<6x16xf32> -> vector<6x16xf32>
    %99 = vector.broadcast %97 : vector<1x16xf32> to vector<6x16xf32>
    %100 = arith.mulf %98, %99 : vector<6x16xf32>
    %c0_27 = arith.constant 0 : index
    %c0_28 = arith.constant 0 : index
    %c0_29 = arith.constant 0 : index
    %101 = vector.load %arg5[%c0_27, %c0_28, %c0_29] : memref<1x4x16xf32, #tpu.memory_space<vmem>>, vector<1x4x16xf32>
    %102 = vector.shape_cast %101 : vector<1x4x16xf32> to vector<4x16xf32>
    %c0_30 = arith.constant 0 : index
    %c0_31 = arith.constant 0 : index
    %103 = vector.load %arg6[%c0_30, %c0_31] : memref<16x6xf32, #tpu.memory_space<vmem>>, vector<16x6xf32>
    %cst_32 = arith.constant dense<0.000000e+00> : vector<16x16xf32>
    %104 = tpu.matmul %103, %100, %cst_32 {dimension_numbers = #tpu.dot_dimension_numbers<[1], [0], [0], [1], [0, 0, 1, 1], [], []>} : vector<16x6xf32>, vector<6x16xf32>, vector<16x16xf32> -> vector<16x16xf32>
    %c0_33 = arith.constant 0 : index
    %c0_34 = arith.constant 0 : index
    %105 = vector.load %arg7[%c0_33, %c0_34] : memref<16x4xf32, #tpu.memory_space<vmem>>, vector<16x4xf32>
    %cst_35 = arith.constant dense<0.000000e+00> : vector<16x16xf32>
    %106 = tpu.matmul %105, %102, %cst_35 {dimension_numbers = #tpu.dot_dimension_numbers<[1], [0], [0], [1], [0, 0, 1, 1], [], []>} : vector<16x4xf32>, vector<4x16xf32>, vector<16x16xf32> -> vector<16x16xf32>
    %107 = arith.addf %104, %106 : vector<16x16xf32>
    %c0_36 = arith.constant 0 : index
    %c0_37 = arith.constant 0 : index
    %108 = vector.load %arg8[%c0_36, %c0_37] : memref<16x1xf32, #tpu.memory_space<vmem>>, vector<16x1xf32>
    %109 = vector.broadcast %108 : vector<16x1xf32> to vector<16x16xf32>
    %110 = arith.addf %107, %109 : vector<16x16xf32>
    %cst_38 = arith.constant 0.000000e+00 : f32
    %111 = vector.broadcast %cst_38 : f32 to vector<16x16xf32>
    %112 = arith.maximumf %110, %111 : vector<16x16xf32>
    %c0_39 = arith.constant 0 : index
    %c0_40 = arith.constant 0 : index
    %113 = vector.load %arg9[%c0_39, %c0_40] : memref<8x16xf32, #tpu.memory_space<vmem>>, vector<8x16xf32>
    %c0_41 = arith.constant 0 : index
    %c0_42 = arith.constant 0 : index
    %114 = vector.load %arg10[%c0_41, %c0_42] : memref<8x1xf32, #tpu.memory_space<vmem>>, vector<8x1xf32>
    %cst_43 = arith.constant dense<0.000000e+00> : vector<8x16xf32>
    %115 = tpu.matmul %113, %112, %cst_43 {dimension_numbers = #tpu.dot_dimension_numbers<[1], [0], [0], [1], [0, 0, 1, 1], [], []>} : vector<8x16xf32>, vector<16x16xf32>, vector<8x16xf32> -> vector<8x16xf32>
    %116 = vector.broadcast %114 : vector<8x1xf32> to vector<8x16xf32>
    %117 = arith.addf %115, %116 : vector<8x16xf32>
    %cst_44 = arith.constant 0.000000e+00 : f32
    %118 = vector.broadcast %cst_44 : f32 to vector<8x16xf32>
    %119 = arith.maximumf %117, %118 : vector<8x16xf32>
    %c0_45 = arith.constant 0 : index
    %c0_46 = arith.constant 0 : index
    %c0_47 = arith.constant 0 : index
    %120 = vector.load %arg11[%c0_45, %c0_46, %c0_47] : memref<1x8x16xf32, #tpu.memory_space<vmem>>, vector<1x8x16xf32>
    %121 = vector.shape_cast %120 : vector<1x8x16xf32> to vector<8x16xf32>
    %122 = vector.shape_cast %119 : vector<8x16xf32> to vector<1x8x16xf32>
    tpu.vector_store %arg11[%c0_45, %c0_46, %c0_47], %122 {strides = array<i32>} : memref<1x8x16xf32, #tpu.memory_space<vmem>>, vector<1x8x16xf32>,
    return
  }
  func.func @transform_0(%arg0: i32, %arg1: i32) -> (i32, i32, i32) {
    %c0_i32 = arith.constant 0 : i32
    %c0_i32_0 = arith.constant 0 : i32
    return %arg0, %c0_i32, %arg1 : i32, i32, i32
  }
  func.func @transform_1(%arg0: i32, %arg1: i32) -> (i32, i32, i32) {
    %c0_i32 = arith.constant 0 : i32
    %c0_i32_0 = arith.constant 0 : i32
    %c0_i32_1 = arith.constant 0 : i32
    return %arg0, %c0_i32, %c0_i32_0 : i32, i32, i32
  }
  func.func @transform_2(%arg0: i32, %arg1: i32) -> (i32, i32, i32) {
    %c0_i32 = arith.constant 0 : i32
    %c0_i32_0 = arith.constant 0 : i32
    %c0_i32_1 = arith.constant 0 : i32
    return %arg0, %c0_i32, %c0_i32_0 : i32, i32, i32
  }
  func.func @transform_3(%arg0: i32, %arg1: i32) -> (i32, i32, i32) {
    %c0_i32 = arith.constant 0 : i32
    %c0_i32_0 = arith.constant 0 : i32
    return %arg0, %c0_i32, %arg1 : i32, i32, i32
  }
  func.func @transform_4(%arg0: i32, %arg1: i32) -> (i32, i32) {
    %c0_i32 = arith.constant 0 : i32
    %c0_i32_0 = arith.constant 0 : i32
    %c0_i32_1 = arith.constant 0 : i32
    return %c0_i32, %c0_i32_0 : i32, i32
  }
  func.func @transform_5(%arg0: i32, %arg1: i32) -> (i32, i32) {
    %c0_i32 = arith.constant 0 : i32
    %c0_i32_0 = arith.constant 0 : i32
    %c0_i32_1 = arith.constant 0 : i32
    return %c0_i32, %c0_i32_0 : i32, i32
  }
  func.func @transform_6(%arg0: i32, %arg1: i32) -> (i32, i32) {
    %c0_i32 = arith.constant 0 : i32
    %c0_i32_0 = arith.constant 0 : i32
    %c0_i32_1 = arith.constant 0 : i32
    return %c0_i32, %c0_i32_0 : i32, i32
  }
  func.func @transform_7(%arg0: i32, %arg1: i32) -> (i32, i32) {
    %c0_i32 = arith.constant 0 : i32
    %c0_i32_0 = arith.constant 0 : i32
    %c0_i32_1 = arith.constant 0 : i32
    return %c0_i32, %c0_i32_0 : i32, i32
  }
  func.func @transform_8(%arg0: i32, %arg1: i32) -> (i32, i32) {
    %c0_i32 = arith.constant 0 : i32
    %c0_i32_0 = arith.constant 0 : i32
    %c0_i32_1 = arith.constant 0 : i32
    return %c0_i32, %c0_i32_0 : i32, i32
  }
  func.func @transform_9(%arg0: i32, %arg1: i32) -> (i32, i32, i32) {
    %c0_i32 = arith.constant 0 : i32
    %c0_i32_0 = arith.constant 0 : i32
    return %arg0, %c0_i32, %arg1 : i32, i32, i32
  }
}

</mosaic_0001>

<llo_original>
// kernel: tpu_custom_call.1
$region0: #{tpu_custom_call.1}
  #allocation0 [shape = 'u32[]', space=smem, size = 0x4, offset = 0x4, fixed_abs, tag = 'smem constant byte address 0x4 - core index']
  #allocation1 [shape = 'u32[144,128]{1,0:T(1,128)}', space=vmem, size = 0x12000, scoped, tag = 'internal scratch']
  %s0 = inlined_call_operand.vmem [shape: f32[2,3,16], index: 0, kind: input, shape index: {}]
  %s1 = inlined_call_operand.vmem [shape: f32[2,8,3], index: 1, kind: input, shape index: {}]
  %s2 = inlined_call_operand.vmem [shape: f32[2,6,8], index: 2, kind: input, shape index: {}]
  %s3 = inlined_call_operand.vmem [shape: f32[2,4,16], index: 3, kind: input, shape index: {}]
  %s4 = inlined_call_operand.vmem [shape: f32[16,6], index: 4, kind: input, shape index: {}]
  %s5 = inlined_call_operand.vmem [shape: f32[16,4], index: 5, kind: input, shape index: {}]
  %s6 = inlined_call_operand.vmem [shape: f32[16,1], index: 6, kind: input, shape index: {}]
  %s7 = inlined_call_operand.vmem [shape: f32[8,16], index: 7, kind: input, shape index: {}]
  %s8 = inlined_call_operand.vmem [shape: f32[8,1], index: 8, kind: input, shape index: {}]
  %s9 = inlined_call_operand.hbm [shape: f32[2,8,16], index: 9, kind: output, shape index: {}]
  %s10 = sld [smem:[#allocation0]]
  $region69: #{tpu_custom_call.1} parent=0
    _
  %s12 = ssub.s32 1, %s10
  %s13 = scalar_select 0, %s12, %s10
  $region1: #{tpu_custom_call.1} parent=0
    #allocation2 [shape = 'u8[8192]{0}', space=vmem, size = 0x2000, scoped, tag = 'output window, operand 0']
    #allocation3 [shape = 's32[2]{0}', space=sflag, size = 0x8, scoped, tag = 'scoped memory for tpu_custom_call.1']
    %14 = vsyncpa [#allocation3], 0
    %s15 = scalar_lea.sflag [#allocation3], 1
    %16 = vsyncpa %s15, 0
    loop: start=0, step=1, limit=4
    $region2: #{tpu_custom_call.1} parent=1 // loop_pre_header
      _
    $region3: #{tpu_custom_call.1} parent=1 // loop_header
      %s18 = sphi 0, %s22
      %p19 = scmp.ge.s32.totalorder %s18, 4
      %s25 = sphi 0, %s37
      %s26 = sphi 0, %s33
      %s27 = sphi 0, %s25
      %s28 = sphi 0, %s26
      %s29 = sphi 0, %s27
      %s30 = sphi 0, %s28
      %s42 = sphi 0, %s44
      %s45 = sphi 0, %s42
      %s46 = sphi 0, %s45
      %s62 = sphi 0, %s46
      %s68 = sphi 0, %s70
      %s71 = sphi 0, %s68
      %s72 = sphi 0, %s71
      %s88 = sphi 0, %s72
      %s94 = sphi 0, %s96
      %s97 = sphi 0, %s94
      %s98 = sphi 0, %s97
      %s114 = sphi 0, %s98
      %s122 = sphi 0, %s124
      %s125 = sphi 0, %s122
      %s126 = sphi 0, %s125
      %s142 = sphi 0, %s126
      %s146 = sphi 0, %s146
      %s148 = sphi 0, %s146
      %s149 = sphi 0, %s148
      %s163 = sphi 0, %s149
      %s167 = sphi 0, %s167
      %s169 = sphi 0, %s167
      %s170 = sphi 0, %s169
      %s184 = sphi 0, %s170
      %s188 = sphi 0, %s188
      %s190 = sphi 0, %s188
      %s191 = sphi 0, %s190
      %s205 = sphi 0, %s191
      %s209 = sphi 0, %s209
      %s211 = sphi 0, %s209
      %s212 = sphi 0, %s211
      %s226 = sphi 0, %s212
      %s230 = sphi 0, %s230
      %s232 = sphi 0, %s230
      %s233 = sphi 0, %s232
      %s247 = sphi 0, %s233
      %s255 = sphi 0, %s257
      %s258 = sphi 0, %s255
      %s259 = sphi 0, %s258
      %s275 = sphi 0, %s259
    $region4: #{tpu_custom_call.1} parent=1 // loop_header_branch
      %21 = sbr.rel (%p19) target = $region8
    $region5: #{tpu_custom_call.1} parent=1 // loop_body
      %s23 = ssub.s32 %s18, 1
      %s24 = ssub.s32 %s18, 2
      %s31 = sadd.s32 1, %s26
      %p32 = scmp.ge.s32.totalorder %s31, 1
      %s33 = scalar_select %p32, 0, %s31
      %s34 = sadd.s32 1, %s25
      %s35 = scalar_select %p32, %s34, %s25
      %p36 = scmp.ge.s32.totalorder %s35, 2
      %s37 = scalar_select %p36, 0, %s35
      %s38 = ssub.s32 %s25, %s37
      %s39 = ssub.s32 %s26, %s33
      %s40 = sor.u32 %s38, %s39
      %p41 = scmp.eq.s32.totalorder %s40, 0
      %s43 = sadd.s32 %s42, 1
      %s44 = scalar_select %p41, %s42, %s43
      %p47 = pneg %p41
      %p48 = scmp.eq.s32.totalorder %s18, 1
      %p49 = por %p47, %p48
      %p50 = scmp.ne.s32.totalorder %s42, %s45
      %p51 = scmp.eq.s32.totalorder %s18, 0
      %p52 = por %p50, %p51
      %p53 = scmp.ne.s32.totalorder %s42, %s45
      %p54 = scmp.eq.s32.totalorder %s23, 1
      %p55 = por %p53, %p54
      %p56 = scmp.ne.s32.totalorder %s45, %s46
      %p57 = scmp.eq.s32.totalorder %s23, 0
      %p58 = por %p56, %p57
      %p59 = scmp.ne.s32.totalorder %s45, %s46
      %p60 = scmp.eq.s32.totalorder %s24, 1
      %p61 = por %p59, %p60
      %p63 = scmp.ne.s32.totalorder %s46, %s62
      %p64 = scmp.eq.s32.totalorder %s24, 0
      %p65 = por %p63, %p64
      %s66 = ssub.s32 %s25, %s37
      %p67 = scmp.eq.s32.totalorder %s66, 0
      %s69 = sadd.s32 %s68, 1
      %s70 = scalar_select %p67, %s68, %s69
      %p73 = pneg %p67
      %p74 = scmp.eq.s32.totalorder %s18, 1
      %p75 = por %p73, %p74
      %p76 = scmp.ne.s32.totalorder %s68, %s71
      %p77 = scmp.eq.s32.totalorder %s18, 0
      %p78 = por %p76, %p77
      %p79 = scmp.ne.s32.totalorder %s68, %s71
      %p80 = scmp.eq.s32.totalorder %s23, 1
      %p81 = por %p79, %p80
      %p82 = scmp.ne.s32.totalorder %s71, %s72
      %p83 = scmp.eq.s32.totalorder %s23, 0
      %p84 = por %p82, %p83
      %p85 = scmp.ne.s32.totalorder %s71, %s72
      %p86 = scmp.eq.s32.totalorder %s24, 1
      %p87 = por %p85, %p86
      %p89 = scmp.ne.s32.totalorder %s72, %s88
      %p90 = scmp.eq.s32.totalorder %s24, 0
      %p91 = por %p89, %p90
      %s92 = ssub.s32 %s25, %s37
      %p93 = scmp.eq.s32.totalorder %s92, 0
      %s95 = sadd.s32 %s94, 1
      %s96 = scalar_select %p93, %s94, %s95
      %p99 = pneg %p93
      %p100 = scmp.eq.s32.totalorder %s18, 1
      %p101 = por %p99, %p100
      %p102 = scmp.ne.s32.totalorder %s94, %s97
      %p103 = scmp.eq.s32.totalorder %s18, 0
      %p104 = por %p102, %p103
      %p105 = scmp.ne.s32.totalorder %s94, %s97
      %p106 = scmp.eq.s32.totalorder %s23, 1
      %p107 = por %p105, %p106
      %p108 = scmp.ne.s32.totalorder %s97, %s98
      %p109 = scmp.eq.s32.totalorder %s23, 0
      %p110 = por %p108, %p109
      %p111 = scmp.ne.s32.totalorder %s97, %s98
      %p112 = scmp.eq.s32.totalorder %s24, 1
      %p113 = por %p111, %p112
      %p115 = scmp.ne.s32.totalorder %s98, %s114
      %p116 = scmp.eq.s32.totalorder %s24, 0
      %p117 = por %p115, %p116
      %s118 = ssub.s32 %s25, %s37
      %s119 = ssub.s32 %s26, %s33
      %s120 = sor.u32 %s118, %s119
      %p121 = scmp.eq.s32.totalorder %s120, 0
      %s123 = sadd.s32 %s122, 1
      %s124 = scalar_select %p121, %s122, %s123
      %p127 = pneg %p121
      %p128 = scmp.eq.s32.totalorder %s18, 1
      %p129 = por %p127, %p128
      %p130 = scmp.ne.s32.totalorder %s122, %s125
      %p131 = scmp.eq.s32.totalorder %s18, 0
      %p132 = por %p130, %p131
      %p133 = scmp.ne.s32.totalorder %s122, %s125
      %p134 = scmp.eq.s32.totalorder %s23, 1
      %p135 = por %p133, %p134
      %p136 = scmp.ne.s32.totalorder %s125, %s126
      %p137 = scmp.eq.s32.totalorder %s23, 0
      %p138 = por %p136, %p137
      %p139 = scmp.ne.s32.totalorder %s125, %s126
      %p140 = scmp.eq.s32.totalorder %s24, 1
      %p141 = por %p139, %p140
      %p143 = scmp.ne.s32.totalorder %s126, %s142
      %p144 = scmp.eq.s32.totalorder %s24, 0
      %p145 = por %p143, %p144
      %s147 = sadd.s32 %s146, 1
      %p150 = scmp.eq.s32.totalorder %s18, 1
      %p151 = scmp.ne.s32.totalorder %s146, %s148
      %p152 = scmp.eq.s32.totalorder %s18, 0
      %p153 = por %p151, %p152
      %p154 = scmp.ne.s32.totalorder %s146, %s148
      %p155 = scmp.eq.s32.totalorder %s23, 1
      %p156 = por %p154, %p155
      %p157 = scmp.ne.s32.totalorder %s148, %s149
      %p158 = scmp.eq.s32.totalorder %s23, 0
      %p159 = por %p157, %p158
      %p160 = scmp.ne.s32.totalorder %s148, %s149
      %p161 = scmp.eq.s32.totalorder %s24, 1
      %p162 = por %p160, %p161
      %p164 = scmp.ne.s32.totalorder %s149, %s163
      %p165 = scmp.eq.s32.totalorder %s24, 0
      %p166 = por %p164, %p165
      %s168 = sadd.s32 %s167, 1
      %p171 = scmp.eq.s32.totalorder %s18, 1
      %p172 = scmp.ne.s32.totalorder %s167, %s169
      %p173 = scmp.eq.s32.totalorder %s18, 0
      %p174 = por %p172, %p173
      %p175 = scmp.ne.s32.totalorder %s167, %s169
      %p176 = scmp.eq.s32.totalorder %s23, 1
      %p177 = por %p175, %p176
      %p178 = scmp.ne.s32.totalorder %s169, %s170
      %p179 = scmp.eq.s32.totalorder %s23, 0
      %p180 = por %p178, %p179
      %p181 = scmp.ne.s32.totalorder %s169, %s170
      %p182 = scmp.eq.s32.totalorder %s24, 1
      %p183 = por %p181, %p182
      %p185 = scmp.ne.s32.totalorder %s170, %s184
      %p186 = scmp.eq.s32.totalorder %s24, 0
      %p187 = por %p185, %p186
      %s189 = sadd.s32 %s188, 1
      %p192 = scmp.eq.s32.totalorder %s18, 1
      %p193 = scmp.ne.s32.totalorder %s188, %s190
      %p194 = scmp.eq.s32.totalorder %s18, 0
      %p195 = por %p193, %p194
      %p196 = scmp.ne.s32.totalorder %s188, %s190
      %p197 = scmp.eq.s32.totalorder %s23, 1
      %p198 = por %p196, %p197
      %p199 = scmp.ne.s32.totalorder %s190, %s191
      %p200 = scmp.eq.s32.totalorder %s23, 0
      %p201 = por %p199, %p200
      %p202 = scmp.ne.s32.totalorder %s190, %s191
      %p203 = scmp.eq.s32.totalorder %s24, 1
      %p204 = por %p202, %p203
      %p206 = scmp.ne.s32.totalorder %s191, %s205
      %p207 = scmp.eq.s32.totalorder %s24, 0
      %p208 = por %p206, %p207
      %s210 = sadd.s32 %s209, 1
      %p213 = scmp.eq.s32.totalorder %s18, 1
      %p214 = scmp.ne.s32.totalorder %s209, %s211
      %p215 = scmp.eq.s32.totalorder %s18, 0
      %p216 = por %p214, %p215
      %p217 = scmp.ne.s32.totalorder %s209, %s211
      %p218 = scmp.eq.s32.totalorder %s23, 1
      %p219 = por %p217, %p218
      %p220 = scmp.ne.s32.totalorder %s211, %s212
      %p221 = scmp.eq.s32.totalorder %s23, 0
      %p222 = por %p220, %p221
      %p223 = scmp.ne.s32.totalorder %s211, %s212
      %p224 = scmp.eq.s32.totalorder %s24, 1
      %p225 = por %p223, %p224
      %p227 = scmp.ne.s32.totalorder %s212, %s226
      %p228 = scmp.eq.s32.totalorder %s24, 0
      %p229 = por %p227, %p228
      %s231 = sadd.s32 %s230, 1
      %p234 = scmp.eq.s32.totalorder %s18, 1
      %p235 = scmp.ne.s32.totalorder %s230, %s232
      %p236 = scmp.eq.s32.totalorder %s18, 0
      %p237 = por %p235, %p236
      %p238 = scmp.ne.s32.totalorder %s230, %s232
      %p239 = scmp.eq.s32.totalorder %s23, 1
      %p240 = por %p238, %p239
      %p241 = scmp.ne.s32.totalorder %s232, %s233
      %p242 = scmp.eq.s32.totalorder %s23, 0
      %p243 = por %p241, %p242
      %p244 = scmp.ne.s32.totalorder %s232, %s233
      %p245 = scmp.eq.s32.totalorder %s24, 1
      %p246 = por %p244, %p245
      %p248 = scmp.ne.s32.totalorder %s233, %s247
      %p249 = scmp.eq.s32.totalorder %s24, 0
      %p250 = por %p248, %p249
      %s251 = ssub.s32 %s25, %s37
      %s252 = ssub.s32 %s26, %s33
      %s253 = sor.u32 %s251, %s252
      %p254 = scmp.eq.s32.totalorder %s253, 0
      %s256 = sadd.s32 %s255, 1
      %s257 = scalar_select %p254, %s255, %s256
      %p260 = pneg %p254
      %p261 = scmp.eq.s32.totalorder %s18, 1
      %p262 = por %p260, %p261
      %p263 = scmp.ne.s32.totalorder %s255, %s258
      %p264 = scmp.eq.s32.totalorder %s18, 0
      %p265 = por %p263, %p264
      %p266 = scmp.ne.s32.totalorder %s255, %s258
      %p267 = scmp.eq.s32.totalorder %s23, 1
      %p268 = por %p266, %p267
      %p269 = scmp.ne.s32.totalorder %s258, %s259
      %p270 = scmp.eq.s32.totalorder %s23, 0
      %p271 = por %p269, %p270
      %p272 = scmp.ne.s32.totalorder %s258, %s259
      %p273 = scmp.eq.s32.totalorder %s24, 1
      %p274 = por %p272, %p273
      %p276 = scmp.ne.s32.totalorder %s259, %s275
      %p277 = scmp.eq.s32.totalorder %s24, 0
      %p278 = por %p276, %p277
      %p279 = scmp.le.s32.totalorder 1, %s18
      %p280 = scmp.lt.s32.totalorder %s18, 3
      %p281 = pnand %p279, %p280
      %p282 = pneg %p281
      // Predicated region
      $region9: #{tpu_custom_call.1} parent=5 // pred_check
        _
      $region10: #{tpu_custom_call.1} parent=5 // pred_check_branch
        %284 = sbr.rel (%p281) target = $region12
      $region11: #{tpu_custom_call.1} parent=5 // pred_region
        %s285 = ssub.s32 %s18, 1
        // Predicated region
        $region13: #{tpu_custom_call.1} parent=11 // pred_check
          %p286 = pneg %p159
        $region14: #{tpu_custom_call.1} parent=11 // pred_check_branch
          %288 = sbr.rel (%p286) target = $region16
        $region15: #{tpu_custom_call.1} parent=11 // pred_region
          _
        $region16: #{tpu_custom_call.1} parent=11 // pred_fallthru
          _
        // Predicated region
        $region17: #{tpu_custom_call.1} parent=11 // pred_check
          %p289 = pneg %p180
        $region18: #{tpu_custom_call.1} parent=11 // pred_check_branch
          %291 = sbr.rel (%p289) target = $region20
        $region19: #{tpu_custom_call.1} parent=11 // pred_region
          _
        $region20: #{tpu_custom_call.1} parent=11 // pred_fallthru
          _
        // Predicated region
        $region21: #{tpu_custom_call.1} parent=11 // pred_check
          %p292 = pneg %p201
        $region22: #{tpu_custom_call.1} parent=11 // pred_check_branch
          %294 = sbr.rel (%p292) target = $region24
        $region23: #{tpu_custom_call.1} parent=11 // pred_region
          _
        $region24: #{tpu_custom_call.1} parent=11 // pred_fallthru
          _
        // Predicated region
        $region25: #{tpu_custom_call.1} parent=11 // pred_check
          %p295 = pneg %p222
        $region26: #{tpu_custom_call.1} parent=11 // pred_check_branch
          %297 = sbr.rel (%p295) target = $region28
        $region27: #{tpu_custom_call.1} parent=11 // pred_region
          _
        $region28: #{tpu_custom_call.1} parent=11 // pred_fallthru
          _
        // Predicated region
        $region29: #{tpu_custom_call.1} parent=11 // pred_check
          %p298 = pneg %p243
        $region30: #{tpu_custom_call.1} parent=11 // pred_check_branch
          %300 = sbr.rel (%p298) target = $region32
        $region31: #{tpu_custom_call.1} parent=11 // pred_region
          _
        $region32: #{tpu_custom_call.1} parent=11 // pred_fallthru
          _
      $region12: #{tpu_custom_call.1} parent=5 // pred_fallthru
        _
      %p301 = scmp.lt.s32.totalorder %s18, 2
      // Predicated region
      $region33: #{tpu_custom_call.1} parent=5 // pred_check
        %p302 = pneg %p301
      $region34: #{tpu_custom_call.1} parent=5 // pred_check_branch
        %304 = sbr.rel (%p302) target = $region36
      $region35: #{tpu_custom_call.1} parent=5 // pred_region
        // Predicated region
        $region37: #{tpu_custom_call.1} parent=35 // pred_check
          %p305 = pneg %p52
        $region38: #{tpu_custom_call.1} parent=35 // pred_check_branch
          %307 = sbr.rel (%p305) target = $region40
        $region39: #{tpu_custom_call.1} parent=35 // pred_region
          %p308 = scmp.lt.s32.totalorder %s25, 1
          %s309 = scalar_select %p308, %s25, 1
          %p310 = scmp.lt.s32.totalorder %s26, 0
          %s311 = scalar_select %p310, %s26, 0
          %s312 = sadd.s32 %s311, %s309
          %s313 = smul.addr %s312, 4
          %s314 = scalar_lea.vmem %s0, %s313
        $region40: #{tpu_custom_call.1} parent=35 // pred_fallthru
          _
        // Predicated region
        $region41: #{tpu_custom_call.1} parent=35 // pred_check
          %p315 = pneg %p78
        $region42: #{tpu_custom_call.1} parent=35 // pred_check_branch
          %317 = sbr.rel (%p315) target = $region44
        $region43: #{tpu_custom_call.1} parent=35 // pred_region
          %p318 = scmp.lt.s32.totalorder %s25, 1
          %s319 = scalar_select %p318, %s25, 1
          %s320 = smul.addr %s319, 8
          %s321 = scalar_lea.vmem %s1, %s320
        $region44: #{tpu_custom_call.1} parent=35 // pred_fallthru
          _
        // Predicated region
        $region45: #{tpu_custom_call.1} parent=35 // pred_check
          %p322 = pneg %p104
        $region46: #{tpu_custom_call.1} parent=35 // pred_check_branch
          %324 = sbr.rel (%p322) target = $region48
        $region47: #{tpu_custom_call.1} parent=35 // pred_region
          %p325 = scmp.lt.s32.totalorder %s25, 1
          %s326 = scalar_select %p325, %s25, 1
          %s327 = smul.addr %s326, 8
          %s328 = scalar_lea.vmem %s2, %s327
        $region48: #{tpu_custom_call.1} parent=35 // pred_fallthru
          _
        // Predicated region
        $region49: #{tpu_custom_call.1} parent=35 // pred_check
          %p329 = pneg %p132
        $region50: #{tpu_custom_call.1} parent=35 // pred_check_branch
          %331 = sbr.rel (%p329) target = $region52
        $region51: #{tpu_custom_call.1} parent=35 // pred_region
          %p332 = scmp.lt.s32.totalorder %s25, 1
          %s333 = scalar_select %p332, %s25, 1
          %p334 = scmp.lt.s32.totalorder %s26, 0
          %s335 = scalar_select %p334, %s26, 0
          %s336 = sadd.s32 %s335, %s333
          %s337 = smul.addr %s336, 4
          %s338 = scalar_lea.vmem %s3, %s337
        $region52: #{tpu_custom_call.1} parent=35 // pred_fallthru
          _
      $region36: #{tpu_custom_call.1} parent=5 // pred_fallthru
        _
      %p339 = scmp.le.s32.totalorder 1, %s18
      %p340 = scmp.lt.s32.totalorder %s18, 3
      %p341 = pnand %p339, %p340
      %p342 = pneg %p341
      // Predicated region
      $region53: #{tpu_custom_call.1} parent=5 // pred_check
        _
      $region54: #{tpu_custom_call.1} parent=5 // pred_check_branch
        %344 = sbr.rel (%p341) target = $region56
      $region55: #{tpu_custom_call.1} parent=5 // pred_region
        %s345 = ssub.s32 %s18, 1
        %p346 = scmp.lt.s32.totalorder %s27, 1
        %s347 = scalar_select %p346, %s27, 1
        %p348 = scmp.lt.s32.totalorder %s28, 0
        %s349 = scalar_select %p348, %s28, 0
        %s350 = sadd.s32 %s349, %s347
        %s351 = smul.addr %s350, 4
        %s352 = scalar_lea.vmem %s0, %s351
        %p353 = pneg %p58
        %p354 = pneg %p55
        %p355 = scmp.lt.s32.totalorder %s27, 1
        %s356 = scalar_select %p355, %s27, 1
        %s357 = smul.addr %s356, 8
        %s358 = scalar_lea.vmem %s1, %s357
        %p359 = pneg %p84
        %p360 = pneg %p81
        %p361 = scmp.lt.s32.totalorder %s27, 1
        %s362 = scalar_select %p361, %s27, 1
        %s363 = smul.addr %s362, 8
        %s364 = scalar_lea.vmem %s2, %s363
        %p365 = pneg %p110
        %p366 = pneg %p107
        %p367 = scmp.lt.s32.totalorder %s27, 1
        %s368 = scalar_select %p367, %s27, 1
        %p369 = scmp.lt.s32.totalorder %s28, 0
        %s370 = scalar_select %p369, %s28, 0
        %s371 = sadd.s32 %s370, %s368
        %s372 = smul.addr %s371, 4
        %s373 = scalar_lea.vmem %s3, %s372
        %p374 = pneg %p138
        %p375 = pneg %p135
        %p376 = pneg %p159
        %p377 = pneg %p156
        %p378 = pneg %p180
        %p379 = pneg %p177
        %p380 = pneg %p201
        %p381 = pneg %p198
        %p382 = pneg %p222
        %p383 = pneg %p219
        %p384 = pneg %p243
        %p385 = pneg %p240
        %p386 = pneg %p271
        %p387 = pneg %p268
        %s388 = sand.u32 %s258, 1
        %s389 = scalar_lea.sflag [#allocation3], %s388
        %s390 = sand.u32 %s258, 1
        %s391 = smul.addr %s390, 8
        %s392 = scalar_lea.vmem [#allocation2], %s391
        %p393 = scmp.lt.s32.totalorder %s27, 1
        %s394 = scalar_select %p393, %s27, 1
        %p395 = scmp.lt.s32.totalorder %s28, 0
        %s396 = scalar_select %p395, %s28, 0
        %s397 = sadd.s32 %s396, %s394
        %s398 = smul.addr %s397, 4
        %s399 = scalar_lea.vmem %s0, %s398
        %p400 = scmp.lt.s32.totalorder %s27, 1
        %s401 = scalar_select %p400, %s27, 1
        %s402 = smul.addr %s401, 8
        %s403 = scalar_lea.vmem %s1, %s402
        %p404 = scmp.lt.s32.totalorder %s27, 1
        %s405 = scalar_select %p404, %s27, 1
        %s406 = smul.addr %s405, 8
        %s407 = scalar_lea.vmem %s2, %s406
        %p408 = scmp.lt.s32.totalorder %s27, 1
        %s409 = scalar_select %p408, %s27, 1
        %p410 = scmp.lt.s32.totalorder %s28, 0
        %s411 = scalar_select %p410, %s28, 0
        %s412 = sadd.s32 %s411, %s409
        %s413 = smul.addr %s412, 4
        %s414 = scalar_lea.vmem %s3, %s413
        %v415 = vld [vmem:[%s399] sm:$0x7]
        %v416 = vld [vmem:[%s403] sm:$0xff]
        %418 = vset.pattern.permute.xlu0 0
        %419 = vperm.xlu0 %418, %v416
        %v420 = vpop.permute.xlu0 %419
        %v422 = vlaneseq
        %v423 = vshrl.u32 %v422, 7
        %v424 = vsub.s32 0, %v423
        %v425 = vrot.slane %v415, %v424
        %v426 = vsub.f32 %v420, %v425
        %v427 = vmul.f32 %v426, %v426
        %428 = vset.pattern.permute.xlu0 1
        %429 = vperm.xlu0 %428, %v416
        %v430 = vpop.permute.xlu0 %429
        %v432 = vlaneseq
        %v433 = vshrl.u32 %v432, 7
        %v434 = vsub.s32 1, %v433
        %v435 = vrot.slane %v415, %v434
        %v436 = vsub.f32 %v430, %v435
        %v437 = vmul.f32 %v436, %v436
        %v438 = vadd.f32 %v427, %v437
        %439 = vset.pattern.permute.xlu0 2
        %440 = vperm.xlu0 %439, %v416
        %v441 = vpop.permute.xlu0 %440
        %v443 = vlaneseq
        %v444 = vshrl.u32 %v443, 7
        %v445 = vsub.s32 2, %v444
        %v446 = vrot.slane %v415, %v445
        %v447 = vsub.f32 %v441, %v446
        %v448 = vmul.f32 %v447, %v447
        %v449 = vadd.f32 %v438, %v448
        %v450 = vlaneseq
        %v451 = vshrl.u32 %v450, 7
        %vm452 = vcmask 130048
        %v453 = vsel %vm452, %v449, inf
        %v454 = vrot.slane %v453, 4
        %v455 = vmin.f32 %v453, %v454
        %v456 = vrot.slane %v455, 2
        %v457 = vmin.f32 %v455, %v456
        %v458 = vrot.slane %v457, 1
        %v459 = vmin.f32 %v457, %v458
        %vm460 = vcmp.le.f32.partialorder %v449, %v459
        %v461 = vsel %vm460, %v451, 8
        %v462 = vsel %vm452, %v461, 2147483647
        %v463 = vrot.slane %v462, 4
        %vm464 = vcmp.lt.s32.totalorder %v462, %v463
        %v465 = vsel %vm464, %v462, %v463
        %v466 = vrot.slane %v465, 2
        %vm467 = vcmp.lt.s32.totalorder %v465, %v466
        %v468 = vsel %vm467, %v465, %v466
        %v469 = vrot.slane %v468, 1
        %vm470 = vcmp.lt.s32.totalorder %v468, %v469
        %v471 = vsel %vm470, %v468, %v469
        %vm472 = vcmp.eq.s32.totalorder %v451, %v471
        %v473 = vrsqrt.pop %v459
        %v474 = vmul.f32 %v459, %v473
        %vm475 = vcmp.eq.f32.partialorder %v459, inf
        %v476 = vsel %vm475, %v459, %v474
        %vm477 = vcmp.eq.f32.partialorder %v459, 0.0
        %v478 = vand.u32 %v459, 2147483648
        %v479 = vsel %vm477, %v478, %v476
        %v480 = vadd.f32 %v479, 1e-08
        %v481 = vrcp.pop %v480
        %v482 = vmul.f32 1.0, %v481
        %v483 = vsel %vm472, 1, 0
        %v484 = vcvt.s32.f32 %v483
        %v485 = vmul.f32 %v482, %v484
        %v486 = vadd.f32 %v485, 0.0
        %v487 = vadd.f32 %v482, 0.0
        %v488 = vsel %vm472, 1e+30, %v449
        %v489 = vsel %vm452, %v488, inf
        %v490 = vrot.slane %v489, 4
        %v491 = vmin.f32 %v489, %v490
        %v492 = vrot.slane %v491, 2
        %v493 = vmin.f32 %v491, %v492
        %v494 = vrot.slane %v493, 1
        %v495 = vmin.f32 %v493, %v494
        %vm496 = vcmp.le.f32.partialorder %v488, %v495
        %v497 = vsel %vm496, %v451, 8
        %v498 = vsel %vm452, %v497, 2147483647
        %v499 = vrot.slane %v498, 4
        %vm500 = vcmp.lt.s32.totalorder %v498, %v499
        %v501 = vsel %vm500, %v498, %v499
        %v502 = vrot.slane %v501, 2
        %vm503 = vcmp.lt.s32.totalorder %v501, %v502
        %v504 = vsel %vm503, %v501, %v502
        %v505 = vrot.slane %v504, 1
        %vm506 = vcmp.lt.s32.totalorder %v504, %v505
        %v507 = vsel %vm506, %v504, %v505
        %vm508 = vcmp.eq.s32.totalorder %v451, %v507
        %v509 = vrsqrt.pop %v495
        %v510 = vmul.f32 %v495, %v509
        %vm511 = vcmp.eq.f32.partialorder %v495, inf
        %v512 = vsel %vm511, %v495, %v510
        %vm513 = vcmp.eq.f32.partialorder %v495, 0.0
        %v514 = vand.u32 %v495, 2147483648
        %v515 = vsel %vm513, %v514, %v512
        %v516 = vadd.f32 %v515, 1e-08
        %v517 = vrcp.pop %v516
        %v518 = vmul.f32 1.0, %v517
        %v519 = vsel %vm508, 1, 0
        %v520 = vcvt.s32.f32 %v519
        %v521 = vmul.f32 %v518, %v520
        %v522 = vadd.f32 %v486, %v521
        %v523 = vadd.f32 %v487, %v518
        %v524 = vsel %vm508, 1e+30, %v488
        %v525 = vsel %vm452, %v524, inf
        %v526 = vrot.slane %v525, 4
        %v527 = vmin.f32 %v525, %v526
        %v528 = vrot.slane %v527, 2
        %v529 = vmin.f32 %v527, %v528
        %v530 = vrot.slane %v529, 1
        %v531 = vmin.f32 %v529, %v530
        %vm532 = vcmp.le.f32.partialorder %v524, %v531
        %v533 = vsel %vm532, %v451, 8
        %v534 = vsel %vm452, %v533, 2147483647
        %v535 = vrot.slane %v534, 4
        %vm536 = vcmp.lt.s32.totalorder %v534, %v535
        %v537 = vsel %vm536, %v534, %v535
        %v538 = vrot.slane %v537, 2
        %vm539 = vcmp.lt.s32.totalorder %v537, %v538
        %v540 = vsel %vm539, %v537, %v538
        %v541 = vrot.slane %v540, 1
        %vm542 = vcmp.lt.s32.totalorder %v540, %v541
        %v543 = vsel %vm542, %v540, %v541
        %vm544 = vcmp.eq.s32.totalorder %v451, %v543
        %v545 = vrsqrt.pop %v531
        %v546 = vmul.f32 %v531, %v545
        %vm547 = vcmp.eq.f32.partialorder %v531, inf
        %v548 = vsel %vm547, %v531, %v546
        %vm549 = vcmp.eq.f32.partialorder %v531, 0.0
        %v550 = vand.u32 %v531, 2147483648
        %v551 = vsel %vm549, %v550, %v548
        %v552 = vadd.f32 %v551, 1e-08
        %v553 = vrcp.pop %v552
        %v554 = vmul.f32 1.0, %v553
        %v555 = vsel %vm544, 1, 0
        %v556 = vcvt.s32.f32 %v555
        %v557 = vmul.f32 %v554, %v556
        %v558 = vadd.f32 %v522, %v557
        %v559 = vadd.f32 %v523, %v554
        %v560 = vld [vmem:[%s407] sm:$0x3f]
        %v561 = vrcp.pop %v559
        %v562 = vmul.f32 1.0, %v561
        %vm563 = vcmask 64512
        %v565 = vsel %vm563, %v560, 0
        %567 = vmatprep.subr.mxu0 0.0
        %568 = vmatpush1.msra.mxu0 %v558
        %569 = vmatprep.subr.mxu0 0.0
        %570 = vmatpush1.msra.mxu0 0.0
        %571 = vmatprep.subr.mxu0 0.0
        %572 = vmatpush1.msra.mxu0 0.0
        %573 = vmatprep.subr.mxu0 0.0
        %574 = vmatpush1.msra.mxu0 0.0
        %575 = vmatprep.subr.mxu0 0.0
        %576 = vmatpush1.msra.mxu0 0.0
        %577 = vmatprep.subr.mxu0 0.0
        %578 = vmatpush1.msra.mxu0 0.0
        %579 = vmatprep.subr.mxu0 0.0
        %580 = vmatpush1.msra.mxu0 0.0
        %581 = vmatprep.subr.mxu0 0.0
        %582 = vmatpush1.msra.mxu0 0.0
        %583 = vmatprep.subr.mxu0 0.0
        %584 = vmatpush1.msra.mxu0 0.0
        %585 = vmatprep.subr.mxu0 0.0
        %586 = vmatpush1.msra.mxu0 0.0
        %587 = vmatprep.subr.mxu0 0.0
        %588 = vmatpush1.msra.mxu0 0.0
        %589 = vmatprep.subr.mxu0 0.0
        %590 = vmatpush1.msra.mxu0 0.0
        %591 = vmatprep.subr.mxu0 0.0
        %592 = vmatpush1.msra.mxu0 0.0
        %593 = vmatprep.subr.mxu0 0.0
        %594 = vmatpush1.msra.mxu0 0.0
        %595 = vmatprep.subr.mxu0 0.0
        %596 = vmatpush1.msra.mxu0 0.0
        %597 = vmatprep.subr.mxu0 0.0
        %598 = vmatpush1.msra.mxu0 0.0
        %599 = vmatprep.subr.mxu0 0.0
        %600 = vmatpush1.msra.mxu0 0.0
        %601 = vmatprep.subr.mxu0 0.0
        %602 = vmatpush1.msra.mxu0 0.0
        %603 = vmatprep.subr.mxu0 0.0
        %604 = vmatpush1.msra.mxu0 0.0
        %605 = vmatprep.subr.mxu0 0.0
        %606 = vmatpush1.msra.mxu0 0.0
        %607 = vmatprep.subr.mxu0 0.0
        %608 = vmatpush1.msra.mxu0 0.0
        %609 = vmatprep.subr.mxu0 0.0
        %610 = vmatpush1.msra.mxu0 0.0
        %611 = vmatprep.subr.mxu0 0.0
        %612 = vmatpush1.msra.mxu0 0.0
        %613 = vmatprep.subr.mxu0 0.0
        %614 = vmatpush1.msra.mxu0 0.0
        %615 = vmatprep.subr.mxu0 0.0
        %616 = vmatpush1.msra.mxu0 0.0
        %617 = vmatprep.subr.mxu0 0.0
        %618 = vmatpush1.msra.mxu0 0.0
        %619 = vmatprep.subr.mxu0 0.0
        %620 = vmatpush1.msra.mxu0 0.0
        %621 = vmatprep.subr.mxu0 0.0
        %622 = vmatpush1.msra.mxu0 0.0
        %623 = vmatprep.subr.mxu0 0.0
        %624 = vmatpush1.msra.mxu0 0.0
        %625 = vmatprep.subr.mxu0 0.0
        %626 = vmatpush1.msra.mxu0 0.0
        %627 = vmatprep.subr.mxu0 0.0
        %628 = vmatpush1.msra.mxu0 0.0
        %629 = vmatprep.subr.mxu0 0.0
        %630 = vmatpush1.msra.mxu0 0.0
        %631 = vmatprep.mubr.f32.mxu0 0.0
        %632 = vmatmul.mubr.f32.gmra.mrb[0].mxu0 %v565
        %v633 = vpop.f32.mrb[0].mxu0
        %v634 = vadd.f32 0.0, %v633
        %v635 = vpop.f32.mrb[0].mxu0
        %636 = vdwg.mxu0
        %v637 = vmul.f32 %v634, %v562
        %v638 = vld [vmem:[%s414] sm:$0xf]
        %v639 = vld [vmem:[%s4] sm:$0xff]
        %v640 = vld [vmem:[%s4 + $0x8] sm:$0xff]
        %v641 = vld [vmem:[%s5] sm:$0xff]
        %v642 = vld [vmem:[%s5 + $0x8] sm:$0xff]
        %vm643 = vcmask 31744
        %v645 = vsel %vm643, %v641, 0
        %v648 = vsel %vm643, %v642, 0
        %vm650 = vcmask 1043456
        %v652 = vsel %vm650, %v638, 0
        %654 = vmatprep.subr.mxu0 0.0
        %655 = vmatpush1.msra.mxu0 %v652
        %656 = vmatprep.subr.mxu0 0.0
        %657 = vmatpush1.msra.mxu0 0.0
        %658 = vmatprep.subr.mxu0 0.0
        %659 = vmatpush1.msra.mxu0 0.0
        %660 = vmatprep.subr.mxu0 0.0
        %661 = vmatpush1.msra.mxu0 0.0
        %662 = vmatprep.subr.mxu0 0.0
        %663 = vmatpush1.msra.mxu0 0.0
        %664 = vmatprep.subr.mxu0 0.0
        %665 = vmatpush1.msra.mxu0 0.0
        %666 = vmatprep.subr.mxu0 0.0
        %667 = vmatpush1.msra.mxu0 0.0
        %668 = vmatprep.subr.mxu0 0.0
        %669 = vmatpush1.msra.mxu0 0.0
        %670 = vmatprep.subr.mxu0 0.0
        %671 = vmatpush1.msra.mxu0 0.0
        %672 = vmatprep.subr.mxu0 0.0
        %673 = vmatpush1.msra.mxu0 0.0
        %674 = vmatprep.subr.mxu0 0.0
        %675 = vmatpush1.msra.mxu0 0.0
        %676 = vmatprep.subr.mxu0 0.0
        %677 = vmatpush1.msra.mxu0 0.0
        %678 = vmatprep.subr.mxu0 0.0
        %679 = vmatpush1.msra.mxu0 0.0
        %680 = vmatprep.subr.mxu0 0.0
        %681 = vmatpush1.msra.mxu0 0.0
        %682 = vmatprep.subr.mxu0 0.0
        %683 = vmatpush1.msra.mxu0 0.0
        %684 = vmatprep.subr.mxu0 0.0
        %685 = vmatpush1.msra.mxu0 0.0
        %686 = vmatprep.subr.mxu0 0.0
        %687 = vmatpush1.msra.mxu0 0.0
        %688 = vmatprep.subr.mxu0 0.0
        %689 = vmatpush1.msra.mxu0 0.0
        %690 = vmatprep.subr.mxu0 0.0
        %691 = vmatpush1.msra.mxu0 0.0
        %692 = vmatprep.subr.mxu0 0.0
        %693 = vmatpush1.msra.mxu0 0.0
        %694 = vmatprep.subr.mxu0 0.0
        %695 = vmatpush1.msra.mxu0 0.0
        %696 = vmatprep.subr.mxu0 0.0
        %697 = vmatpush1.msra.mxu0 0.0
        %698 = vmatprep.subr.mxu0 0.0
        %699 = vmatpush1.msra.mxu0 0.0
        %700 = vmatprep.subr.mxu0 0.0
        %701 = vmatpush1.msra.mxu0 0.0
        %702 = vmatprep.subr.mxu0 0.0
        %703 = vmatpush1.msra.mxu0 0.0
        %704 = vmatprep.subr.mxu0 0.0
        %705 = vmatpush1.msra.mxu0 0.0
        %706 = vmatprep.subr.mxu0 0.0
        %707 = vmatpush1.msra.mxu0 0.0
        %708 = vmatprep.subr.mxu0 0.0
        %709 = vmatpush1.msra.mxu0 0.0
        %710 = vmatprep.subr.mxu0 0.0
        %711 = vmatpush1.msra.mxu0 0.0
        %712 = vmatprep.subr.mxu0 0.0
        %713 = vmatpush1.msra.mxu0 0.0
        %714 = vmatprep.subr.mxu0 0.0
        %715 = vmatpush1.msra.mxu0 0.0
        %716 = vmatprep.subr.mxu0 0.0
        %717 = vmatpush1.msra.mxu0 0.0
        %718 = vmatprep.mubr.f32.mxu0 0.0
        %719 = vmatmul.mubr.f32.gmra.mrb[0].mxu0 %v645
        %v720 = vpop.f32.mrb[0].mxu0
        %v721 = vadd.f32 0.0, %v720
        %v722 = vpop.f32.mrb[0].mxu0
        %723 = vmatprep.mubr.f32.mxu0 0.0
        %724 = vmatmul.mubr.f32.gmra.mrb[0].mxu0 %v648
        %v725 = vpop.f32.mrb[0].mxu0
        %v726 = vadd.f32 0.0, %v725
        %v727 = vpop.f32.mrb[0].mxu0
        %728 = vdwg.mxu0
        %vm729 = vcmask 48128
        %v731 = vsel %vm729, %v639, 0
        %v734 = vsel %vm729, %v640, 0
        %vm736 = vcmask 1045504
        %v738 = vsel %vm736, %v637, 0
        %740 = vmatprep.subr.mxu0 0.0
        %741 = vmatpush1.msra.mxu0 %v738
        %742 = vmatprep.subr.mxu0 0.0
        %743 = vmatpush1.msra.mxu0 0.0
        %744 = vmatprep.subr.mxu0 0.0
        %745 = vmatpush1.msra.mxu0 0.0
        %746 = vmatprep.subr.mxu0 0.0
        %747 = vmatpush1.msra.mxu0 0.0
        %748 = vmatprep.subr.mxu0 0.0
        %749 = vmatpush1.msra.mxu0 0.0
        %750 = vmatprep.subr.mxu0 0.0
        %751 = vmatpush1.msra.mxu0 0.0
        %752 = vmatprep.subr.mxu0 0.0
        %753 = vmatpush1.msra.mxu0 0.0
        %754 = vmatprep.subr.mxu0 0.0
        %755 = vmatpush1.msra.mxu0 0.0
        %756 = vmatprep.subr.mxu0 0.0
        %757 = vmatpush1.msra.mxu0 0.0
        %758 = vmatprep.subr.mxu0 0.0
        %759 = vmatpush1.msra.mxu0 0.0
        %760 = vmatprep.subr.mxu0 0.0
        %761 = vmatpush1.msra.mxu0 0.0
        %762 = vmatprep.subr.mxu0 0.0
        %763 = vmatpush1.msra.mxu0 0.0
        %764 = vmatprep.subr.mxu0 0.0
        %765 = vmatpush1.msra.mxu0 0.0
        %766 = vmatprep.subr.mxu0 0.0
        %767 = vmatpush1.msra.mxu0 0.0
        %768 = vmatprep.subr.mxu0 0.0
        %769 = vmatpush1.msra.mxu0 0.0
        %770 = vmatprep.subr.mxu0 0.0
        %771 = vmatpush1.msra.mxu0 0.0
        %772 = vmatprep.subr.mxu0 0.0
        %773 = vmatpush1.msra.mxu0 0.0
        %774 = vmatprep.subr.mxu0 0.0
        %775 = vmatpush1.msra.mxu0 0.0
        %776 = vmatprep.subr.mxu0 0.0
        %777 = vmatpush1.msra.mxu0 0.0
        %778 = vmatprep.subr.mxu0 0.0
        %779 = vmatpush1.msra.mxu0 0.0
        %780 = vmatprep.subr.mxu0 0.0
        %781 = vmatpush1.msra.mxu0 0.0
        %782 = vmatprep.subr.mxu0 0.0
        %783 = vmatpush1.msra.mxu0 0.0
        %784 = vmatprep.subr.mxu0 0.0
        %785 = vmatpush1.msra.mxu0 0.0
        %786 = vmatprep.subr.mxu0 0.0
        %787 = vmatpush1.msra.mxu0 0.0
        %788 = vmatprep.subr.mxu0 0.0
        %789 = vmatpush1.msra.mxu0 0.0
        %790 = vmatprep.subr.mxu0 0.0
        %791 = vmatpush1.msra.mxu0 0.0
        %792 = vmatprep.subr.mxu0 0.0
        %793 = vmatpush1.msra.mxu0 0.0
        %794 = vmatprep.subr.mxu0 0.0
        %795 = vmatpush1.msra.mxu0 0.0
        %796 = vmatprep.subr.mxu0 0.0
        %797 = vmatpush1.msra.mxu0 0.0
        %798 = vmatprep.subr.mxu0 0.0
        %799 = vmatpush1.msra.mxu0 0.0
        %800 = vmatprep.subr.mxu0 0.0
        %801 = vmatpush1.msra.mxu0 0.0
        %802 = vmatprep.subr.mxu0 0.0
        %803 = vmatpush1.msra.mxu0 0.0
        %804 = vmatprep.mubr.f32.mxu0 0.0
        %805 = vmatmul.mubr.f32.gmra.mrb[0].mxu0 %v731
        %v806 = vpop.f32.mrb[0].mxu0
        %v807 = vadd.f32 %v721, %v806
        %v808 = vpop.f32.mrb[0].mxu0
        %809 = vmatprep.mubr.f32.mxu0 0.0
        %810 = vmatmul.mubr.f32.gmra.mrb[0].mxu0 %v734
        %v811 = vpop.f32.mrb[0].mxu0
        %v812 = vadd.f32 %v726, %v811
        %v813 = vpop.f32.mrb[0].mxu0
        %814 = vdwg.mxu0
        %v815 = vld [vmem:[%s6] sm:$0xff]
        %v816 = vld [vmem:[%s6 + $0x8] sm:$0xff]
        %818 = vset.pattern.permute.xlu0 0
        %819 = vperm.xlu0 %818, %v815
        %v820 = vpop.permute.xlu0 %819
        %823 = vset.pattern.permute.xlu0 0
        %824 = vperm.xlu0 %823, %v816
        %v825 = vpop.permute.xlu0 %824
        %v827 = vadd.f32 %v807, %v820
        %v828 = vadd.f32 %v812, %v825
        %v829 = vmax.f32 %v827, 0.0
        %v830 = vmax.f32 %v828, 0.0
        %v831 = vld [vmem:[%s7] sm:$0xff]
        %v832 = vld [vmem:[%s8] sm:$0xff]
        %834 = vset.pattern.permute.xlu0 0
        %835 = vperm.xlu0 %834, %v832
        %v836 = vpop.permute.xlu0 %835
        %v839 = vsel %vm452, %v831, 0
        %841 = vmatprep.subr.mxu0 0.0
        %842 = vmatpush1.msra.mxu0 %v829
        %843 = vmatprep.subr.mxu0 0.0
        %844 = vmatpush1.msra.mxu0 %v830
        %845 = vmatprep.subr.mxu0 0.0
        %846 = vmatpush1.msra.mxu0 0.0
        %847 = vmatprep.subr.mxu0 0.0
        %848 = vmatpush1.msra.mxu0 0.0
        %849 = vmatprep.subr.mxu0 0.0
        %850 = vmatpush1.msra.mxu0 0.0
        %851 = vmatprep.subr.mxu0 0.0
        %852 = vmatpush1.msra.mxu0 0.0
        %853 = vmatprep.subr.mxu0 0.0
        %854 = vmatpush1.msra.mxu0 0.0
        %855 = vmatprep.subr.mxu0 0.0
        %856 = vmatpush1.msra.mxu0 0.0
        %857 = vmatprep.subr.mxu0 0.0
        %858 = vmatpush1.msra.mxu0 0.0
        %859 = vmatprep.subr.mxu0 0.0
        %860 = vmatpush1.msra.mxu0 0.0
        %861 = vmatprep.subr.mxu0 0.0
        %862 = vmatpush1.msra.mxu0 0.0
        %863 = vmatprep.subr.mxu0 0.0
        %864 = vmatpush1.msra.mxu0 0.0
        %865 = vmatprep.subr.mxu0 0.0
        %866 = vmatpush1.msra.mxu0 0.0
        %867 = vmatprep.subr.mxu0 0.0
        %868 = vmatpush1.msra.mxu0 0.0
        %869 = vmatprep.subr.mxu0 0.0
        %870 = vmatpush1.msra.mxu0 0.0
        %871 = vmatprep.subr.mxu0 0.0
        %872 = vmatpush1.msra.mxu0 0.0
        %873 = vmatprep.subr.mxu0 0.0
        %874 = vmatpush1.msra.mxu0 0.0
        %875 = vmatprep.subr.mxu0 0.0
        %876 = vmatpush1.msra.mxu0 0.0
        %877 = vmatprep.subr.mxu0 0.0
        %878 = vmatpush1.msra.mxu0 0.0
        %879 = vmatprep.subr.mxu0 0.0
        %880 = vmatpush1.msra.mxu0 0.0
        %881 = vmatprep.subr.mxu0 0.0
        %882 = vmatpush1.msra.mxu0 0.0
        %883 = vmatprep.subr.mxu0 0.0
        %884 = vmatpush1.msra.mxu0 0.0
        %885 = vmatprep.subr.mxu0 0.0
        %886 = vmatpush1.msra.mxu0 0.0
        %887 = vmatprep.subr.mxu0 0.0
        %888 = vmatpush1.msra.mxu0 0.0
        %889 = vmatprep.subr.mxu0 0.0
        %890 = vmatpush1.msra.mxu0 0.0
        %891 = vmatprep.subr.mxu0 0.0
        %892 = vmatpush1.msra.mxu0 0.0
        %893 = vmatprep.subr.mxu0 0.0
        %894 = vmatpush1.msra.mxu0 0.0
        %895 = vmatprep.subr.mxu0 0.0
        %896 = vmatpush1.msra.mxu0 0.0
        %897 = vmatprep.subr.mxu0 0.0
        %898 = vmatpush1.msra.mxu0 0.0
        %899 = vmatprep.subr.mxu0 0.0
        %900 = vmatpush1.msra.mxu0 0.0
        %901 = vmatprep.subr.mxu0 0.0
        %902 = vmatpush1.msra.mxu0 0.0
        %903 = vmatprep.subr.mxu0 0.0
        %904 = vmatpush1.msra.mxu0 0.0
        %905 = vmatprep.mubr.f32.mxu0 0.0
        %906 = vmatmul.mubr.f32.gmra.mrb[0].mxu0 %v839
        %v907 = vpop.f32.mrb[0].mxu0
        %v908 = vadd.f32 %v836, %v907
        %v909 = vpop.f32.mrb[0].mxu0
        %910 = vdwg.mxu0
        %v911 = vmax.f32 %v908, 0.0
        %912 = vst.msk [vmem:[%s392] sm:$0xff] %vm452, %v911
        %s913 = sand.u32 %s258, 1
        %s914 = scalar_lea.sflag [#allocation3], %s913
        %s915 = sand.u32 %s258, 1
        %s916 = smul.addr %s915, 8
        %s917 = scalar_lea.vmem [#allocation2], %s916
        // Predicated region
        $region57: #{tpu_custom_call.1} parent=55 // pred_check
          %p918 = pneg %p268
        $region58: #{tpu_custom_call.1} parent=55 // pred_check_branch
          %920 = sbr.rel (%p918) target = $region60
        $region59: #{tpu_custom_call.1} parent=55 // pred_region
          %s922 = ssub.s32 128, 128
          %923 = vsyncadd %s914, %s922
          %s924 = sadd.s32 %s28, %s27
          %s925 = smul.addr %s924, 128
          %s926 = scalar_lea.hbm %s9, %s925
          %s928 = sshll.u32 %s917, 4
          %s929 = int_to_ptr.vmem [resolvable:$true] %s928
          %931 = dma.vmem_to_hbm [thread:$0]  %s929, 128, %s926, %s914
        $region60: #{tpu_custom_call.1} parent=55 // pred_fallthru
          _
      $region56: #{tpu_custom_call.1} parent=5 // pred_fallthru
        _
      %p932 = scmp.le.s32.totalorder 2, %s18
      // Predicated region
      $region61: #{tpu_custom_call.1} parent=5 // pred_check
        %p933 = pneg %p932
      $region62: #{tpu_custom_call.1} parent=5 // pred_check_branch
        %935 = sbr.rel (%p933) target = $region64
      $region63: #{tpu_custom_call.1} parent=5 // pred_region
        %s936 = ssub.s32 %s18, 2
        // Predicated region
        $region65: #{tpu_custom_call.1} parent=63 // pred_check
          %p937 = pneg %p274
        $region66: #{tpu_custom_call.1} parent=63 // pred_check_branch
          %939 = sbr.rel (%p937) target = $region68
        $region67: #{tpu_custom_call.1} parent=63 // pred_region
          %s940 = sand.u32 %s259, 1
          %s941 = scalar_lea.sflag [#allocation3], %s940
          %s942 = sand.u32 %s259, 1
          %s943 = smul.addr %s942, 8
          %s944 = scalar_lea.vmem [#allocation2], %s943
          %945 = dma.done %s941, 128
        $region68: #{tpu_custom_call.1} parent=63 // pred_fallthru
          _
      $region64: #{tpu_custom_call.1} parent=5 // pred_fallthru
        _
    $region6: #{tpu_custom_call.1} parent=1 // loop_footer
      %s22 = sadd.s32 1, %s18
    $region7: #{tpu_custom_call.1} parent=1 // loop_footer_branch
      %17 = sbr.rel target = $region3
    $region8: #{tpu_custom_call.1} parent=1 // loop_exit
      _
    %946 = vsyncpa [#allocation3], 1
    %s947 = scalar_lea.sflag [#allocation3], 1
    %948 = vsyncpa %s947, 1

</llo_original>
